<compile_context>
chip_gen: v7x
topology: tpu7x:2x2x1
jax: 0.10.0
libtpu: 0.0.40
codegen_flags: <defaults>
</compile_context>

<pallas_src>
from functools import partial, lru_cache
import math

import jax
import jax.numpy as jnp
from jax import lax
from jax.experimental import pallas as pl
from jax.experimental.pallas import tpu as pltpu

LN_EPS = 1e-5                      # torch.nn.LayerNorm default


def _layernorm(x, gamma, beta):
    mu = jnp.mean(x, axis=-1, keepdims=True)
    var = jnp.mean((x - mu) ** 2, axis=-1, keepdims=True)
    return (x - mu) * lax.rsqrt(var + LN_EPS) * gamma + beta


def _gelu_tanh(x):
    # torch.nn.GELU(approximate='tanh')
    c = jnp.sqrt(2.0 / jnp.pi).astype(x.dtype)
    return 0.5 * x * (1.0 + jnp.tanh(c * (x + 0.044715 * x ** 3)))


# --------------------- generation-aware VMEM / tiling helpers -----------------
def _vmem_limit_bytes():
    """Physical VMEM minus headroom (128 MiB on v5e/v6e, 64 MiB on v7x)."""
    try:
        cap = int(pltpu.get_tpu_info().vmem_capacity_bytes)
    except Exception:
        cap = 64 * 1024 * 1024          # conservative (v7x-sized) fallback
    cap = min(cap, 128 * 1024 * 1024)
    return max(cap - 16 * 1024 * 1024, 32 * 1024 * 1024)


@lru_cache(maxsize=None)
def _single_buffer_supported():
    """Probe whether pipeline_mode=pl.Buffered(buffer_count=1) compiles & runs."""
    try:
        def _k(a_ref, o_ref):
            o_ref[...] = a_ref[...] * 2.0

        with jax.ensure_compile_time_eval():
            fn = pl.pallas_call(
                _k,
                out_shape=jax.ShapeDtypeStruct((8, 128), jnp.float32),
                grid_spec=pltpu.PrefetchScalarGridSpec(
                    num_scalar_prefetch=0,
                    grid=(1,),
                    in_specs=[pl.BlockSpec(
                        (8, 128), lambda i: (0, 0),
                        pipeline_mode=pl.Buffered(buffer_count=1))],
                    out_specs=pl.BlockSpec((8, 128), lambda i: (0, 0))),
            )
            jax.block_until_ready(fn(jnp.ones((8, 128), jnp.float32)))
        return True
    except Exception:
        return False


def _const_spec(shape, index_map):
    """BlockSpec for a grid-invariant operand; single-buffered when available."""
    if _single_buffer_supported():
        return pl.BlockSpec(shape, index_map,
                            pipeline_mode=pl.Buffered(buffer_count=1))
    return pl.BlockSpec(shape, index_map)


def _pick_tile(T, target, multiple):
    """Largest `multiple`-aligned divisor of T that is <= target; T otherwise."""
    if T <= target:
        return T
    best = None
    for t in range(multiple, target + 1, multiple):
        if T % t == 0:
            best = t
    # TODO(synk): pad T to a multiple of `multiple` instead of falling back to
    # the full sequence when T has no aligned divisor <= target.
    return best if best is not None else T


# --------------------------- pass 1: LN1 + QKV --------------------------------
def qkv_kernel(scale, n_head,
               x_ref, ln1_g_ref, ln1_b_ref, w_attn_ref, b_attn_ref,
               q_ref, k_ref, v_ref):
    x = x_ref[0]                                          # (TS, C) f32
    TS, C = x.shape
    hd = C // n_head
    xn = _layernorm(x, ln1_g_ref[...], ln1_b_ref[...])    # f32 stats
    qkv = jnp.dot(xn.astype(w_attn_ref.dtype), w_attn_ref[...],
                  preferred_element_type=jnp.float32) + b_attn_ref[...]
    q = (qkv[:, 0:C] * scale).astype(q_ref.dtype)         # scale folded into q
    kt = qkv[:, C:2 * C].T.astype(k_ref.dtype)            # (C, TS): 2-D transpose
    v = qkv[:, 2 * C:3 * C].astype(v_ref.dtype)
    # Head-major (and K-transposed) writes: static lane/sublane slices only.
    for hh in range(n_head):
        q_ref[0, hh] = q[:, hh * hd:(hh + 1) * hd]        # (TS, hd)
        k_ref[0, hh] = kt[hh * hd:(hh + 1) * hd, :]       # (hd, TS)
        v_ref[0, hh] = v[:, hh * hd:(hh + 1) * hd]        # (TS, hd)


# ------------------ pass 2: attention + proj + LN2 + MLP ----------------------
def attn_mlp_kernel(approx_recip, bf16_exp,
                    x_ref, q_ref, k_ref, v_ref,
                    w_aproj_ref, b_aproj_ref, ln2_g_ref, ln2_b_ref,
                    w_fc_ref, b_fc_ref, w_mproj_ref, b_mproj_ref,
                    o_ref, y_sc):
    x = x_ref[0]                  # (TQ, C)      f32
    q = q_ref[0]                  # (H, TQ, hd)  pre-scaled, matmul dtype
    kt = k_ref[0]                 # (H, hd, T)   pre-transposed
    v = v_ref[0]                  # (H, T,  hd)
    TQ, C = x.shape
    n_head, _, hd = q.shape

    # Scores ('hqd,hdk->hqk'): canonical batched MXU matmul, no relayout of K.
    att = lax.dot_general(q, kt, (((2,), (1,)), ((0,), (0,))),
                          preferred_element_type=jnp.float32)      # (H, TQ, T)
    # No causal mask: reproduces torch's bias[:, :, T:, :T] slice (all ones).
    att = att - jnp.max(att, axis=-1, keepdims=True)
    if bf16_exp:
        p = jnp.exp(att.astype(jnp.bfloat16))   # bf16 EUP exp (v6e/v7x); max/sum stay f32
    else:
        p = jnp.exp(att)
    denom = jnp.sum(p.astype(jnp.float32), axis=-1, keepdims=True)  # f32 row sum
    inv = pl.reciprocal(denom, approx=approx_recip)                 # (H, TQ, 1) f32

    # PV ('hqk,hkd->hqd'): single batched MXU matmul; normalize AFTER PV
    # (hd multiplies instead of T multiplies).
    y = lax.dot_general(p.astype(v.dtype), v, (((2,), (1,)), ((0,), (0,))),
                        preferred_element_type=jnp.float32)         # (H, TQ, hd)
    y = y * inv

    # Head concat into a lane-dense (TQ, C) VMEM slab, then ONE full-depth K=C
    # out-projection matmul (replaces the per-head accumulation loop).
    for hh in range(n_head):
        y_sc[:, hh * hd:(hh + 1) * hd] = y[hh]
    yp = jnp.dot(y_sc[...].astype(w_aproj_ref.dtype), w_aproj_ref[...],
                 preferred_element_type=jnp.float32) + b_aproj_ref[...]
    x1 = x + yp                                                     # residual, f32

    # MLP branch.
    x2 = _layernorm(x1, ln2_g_ref[...], ln2_b_ref[...])
    f = jnp.dot(x2.astype(w_fc_ref.dtype), w_fc_ref[...],
                preferred_element_type=jnp.float32) + b_fc_ref[...]
    f = _gelu_tanh(f)
    m = jnp.dot(f.astype(w_mproj_ref.dtype), w_mproj_ref[...],
                preferred_element_type=jnp.float32) + b_mproj_ref[...]

    o_ref[0] = (x1 + m).astype(o_ref.dtype)


# ------------------------------- wrapper --------------------------------------
def gpt2_block(x, params, n_head, *, matmul_dtype=jnp.float32, tile_target=None):
    """GPT-2 transformer block forward. x: (B, T, C) float32.

    matmul_dtype: dtype fed to the MXU for the large matmuls (weights cast on
    the host side, activations cast in-kernel). LayerNorm / softmax stats /
    residuals and all matmul accumulations stay in float32 either way.
    """
    B, T, C = x.shape
    assert C % n_head == 0
    hd = C // n_head
    scale = 1.0 / math.sqrt(hd)
    mm_dt = jnp.dtype(matmul_dtype)
    wsz = mm_dt.itemsize
    is_bf16 = mm_dt == jnp.dtype(jnp.bfloat16)
    approx_recip = is_bf16
    bf16_exp = is_bf16   # bf16 EUP exp on v6e/v7x; legalized (upcast) on v5e

    vmem_limit = _vmem_limit_bytes()
    if tile_target is None:
        big_vmem = vmem_limit >= 80 * 1024 * 1024          # v5e / v6e (128 MiB)
        if big_vmem:
            tile_target = 512 if is_bf16 else 256
        else:                                              # v7x (64 MiB)
            tile_target = 256 if is_bf16 else 128
    mult = 16 if is_bf16 else 8                            # bf16 sublane packing
    TS = _pick_tile(T, tile_target, mult)                  # row tile, pass 1
    TQ = _pick_tile(T, tile_target, mult)                  # query tile, pass 2
    n_qt = T // TQ
    cast_w = lambda w: w.astype(mm_dt)

    # --------------------- pass 1: fused LN1 + QKV projection -----------------
    cost1 = pl.CostEstimate(
        flops=2 * B * T * C * 3 * C + 10 * B * T * C,
        transcendentals=B * T,
        bytes_accessed=B * T * C * 4 + 3 * C * C * wsz + 5 * C * 4
                       + 3 * B * T * C * wsz)
    q, k, v = pl.pallas_call(
        partial(qkv_kernel, scale, n_head),
        out_shape=(jax.ShapeDtypeStruct((B, n_head, T, hd), mm_dt),   # q head-major
                   jax.ShapeDtypeStruct((B, n_head, hd, T), mm_dt),   # k transposed
                   jax.ShapeDtypeStruct((B, n_head, T, hd), mm_dt)),  # v head-major
        grid_spec=pltpu.PrefetchScalarGridSpec(
            num_scalar_prefetch=0,
            grid=(B, T // TS),
            in_specs=[
                pl.BlockSpec((1, TS, C), lambda b, s: (b, s, 0)),     # x
                _const_spec((1, C), lambda b, s: (0, 0)),             # ln1_g
                _const_spec((1, C), lambda b, s: (0, 0)),             # ln1_b
                _const_spec((C, 3 * C), lambda b, s: (0, 0)),         # w_attn
                _const_spec((1, 3 * C), lambda b, s: (0, 0)),         # b_attn
            ],
            out_specs=(
                pl.BlockSpec((1, n_head, TS, hd), lambda b, s: (b, 0, s, 0)),
                pl.BlockSpec((1, n_head, hd, TS), lambda b, s: (b, 0, 0, s)),
                pl.BlockSpec((1, n_head, TS, hd), lambda b, s: (b, 0, s, 0)),
            ),
        ),
        compiler_params=pltpu.CompilerParams(
            dimension_semantics=("parallel", "parallel"),
            vmem_limit_bytes=vmem_limit),
        cost_estimate=cost1,
    )(x, params["ln1_g"], params["ln1_b"], cast_w(params["w_attn"]),
      params["b_attn"])

    # ------------- pass 2: attention + out-proj + LN2 + MLP + residuals -------
    cost2 = pl.CostEstimate(
        flops=4 * B * T * T * C + 18 * B * T * C * C + 40 * B * T * C,
        transcendentals=B * n_head * T * T + 4 * B * T * C + 2 * B * T,
        bytes_accessed=(2 * B * T * C * 4                   # x in, out
                        + B * T * C * wsz                   # q
                        + 2 * B * T * C * wsz * n_qt        # k, v per query tile
                        + 9 * C * C * wsz + 10 * C * 4))
    out = pl.pallas_call(
        partial(attn_mlp_kernel, approx_recip, bf16_exp),
        out_shape=jax.ShapeDtypeStruct((B, T, C), x.dtype),
        grid_spec=pltpu.PrefetchScalarGridSpec(
            num_scalar_prefetch=0,
            grid=(B, n_qt),
            in_specs=[
                pl.BlockSpec((1, TQ, C), lambda b, i: (b, i, 0)),              # x tile
                pl.BlockSpec((1, n_head, TQ, hd), lambda b, i: (b, 0, i, 0)),  # q tile
                pl.BlockSpec((1, n_head, hd, T), lambda b, i: (b, 0, 0, 0)),   # k^T (full)
                pl.BlockSpec((1, n_head, T, hd), lambda b, i: (b, 0, 0, 0)),   # v (full)
                _const_spec((C, C), lambda b, i: (0, 0)),                      # w_aproj
                _const_spec((1, C), lambda b, i: (0, 0)),                      # b_aproj
                _const_spec((1, C), lambda b, i: (0, 0)),                      # ln2_g
                _const_spec((1, C), lambda b, i: (0, 0)),                      # ln2_b
                _const_spec((C, 4 * C), lambda b, i: (0, 0)),                  # w_fc
                _const_spec((1, 4 * C), lambda b, i: (0, 0)),                  # b_fc
                _const_spec((4 * C, C), lambda b, i: (0, 0)),                  # w_mproj
                _const_spec((1, C), lambda b, i: (0, 0)),                      # b_mproj
            ],
            out_specs=pl.BlockSpec((1, TQ, C), lambda b, i: (b, i, 0)),
            scratch_shapes=[pltpu.VMEM((TQ, C), jnp.float32)],   # head-concat slab
        ),
        compiler_params=pltpu.CompilerParams(
            dimension_semantics=("parallel", "parallel"),
            vmem_limit_bytes=vmem_limit),
        cost_estimate=cost2,
        input_output_aliases={0: 0},   # output aliases x (same shape/dtype; each
                                       # tile is read before its writeback)
    )(x, q, k, v, cast_w(params["w_aproj"]), params["b_aproj"],
      params["ln2_g"], params["ln2_b"],
      cast_w(params["w_fc"]), params["b_fc"], cast_w(params["w_mproj"]),
      params["b_mproj"])
    # TODO(synk): for T >> 1024 (and the f32 path on v7x at C>=768) add
    # flash-style K/V tiling (online softmax over a K grid axis marked
    # "arbitrary") and tile the 4C MLP hidden dim with an f32 accumulator to
    # bound VMEM; not needed at these sizes.
    return out


# ---------------- pure-JAX reference (for correctness check) -----------------
def ref_block(x, p, n_head):
    B, T, C = x.shape
    hd = C // n_head
    h = _layernorm(x, p["ln1_g"][0], p["ln1_b"][0])
    qkv = h @ p["w_attn"] + p["b_attn"][0]
    q, k, v = jnp.split(qkv, 3, axis=-1)
    q = q.reshape(B, T, n_head, hd).transpose(0, 2, 1, 3)
    k = k.reshape(B, T, n_head, hd).transpose(0, 2, 1, 3)
    v = v.reshape(B, T, n_head, hd).transpose(0, 2, 1, 3)
    att = (q @ k.transpose(0, 1, 3, 2)) * (1.0 / hd ** 0.5)
    att = jax.nn.softmax(att, axis=-1)          # masked_fill is a no-op (see note)
    y = (att @ v).transpose(0, 2, 1, 3).reshape(B, T, C)
    y = y @ p["w_aproj"] + p["b_aproj"][0]
    x1 = x + y
    h2 = _layernorm(x1, p["ln2_g"][0], p["ln2_b"][0])
    f = _gelu_tanh(h2 @ p["w_fc"] + p["b_fc"][0])
    m = f @ p["w_mproj"] + p["b_mproj"][0]
    return x1 + m


def init_params(key, n_embd):
    def linear(k, fan_in, fan_out):
        k1, k2 = jax.random.split(k)
        bound = 1.0 / (fan_in ** 0.5)
        w = jax.random.uniform(k1, (fan_in, fan_out), jnp.float32, -bound, bound)
        b = jax.random.uniform(k2, (1, fan_out), jnp.float32, -bound, bound)
        return w, b

    keys = jax.random.split(key, 4)
    w_attn, b_attn = linear(keys[0], n_embd, 3 * n_embd)
    w_aproj, b_aproj = linear(keys[1], n_embd, n_embd)
    w_fc, b_fc = linear(keys[2], n_embd, 4 * n_embd)
    w_mproj, b_mproj = linear(keys[3], 4 * n_embd, n_embd)
    return {
        "ln1_g": jnp.ones((1, n_embd), jnp.float32),
        "ln1_b": jnp.zeros((1, n_embd), jnp.float32),
        "w_attn": w_attn, "b_attn": b_attn,
        "w_aproj": w_aproj, "b_aproj": b_aproj,
        "ln2_g": jnp.ones((1, n_embd), jnp.float32),
        "ln2_b": jnp.zeros((1, n_embd), jnp.float32),
        "w_fc": w_fc, "b_fc": b_fc,
        "w_mproj": w_mproj, "b_mproj": b_mproj,
    }


if __name__ == "__main__":
    # small config: n_embd=32, n_head=4; inputs B=2, T=8
    B, T, C, NH = 2, 8, 32, 4
    key = jax.random.PRNGKey(0)
    kx, kp = jax.random.split(key)
    x = jax.random.normal(kx, (B, T, C), jnp.float32)
    params = init_params(kp, C)

    ref = ref_block(x, params, NH)

    # exact f32 path: must match the reference tightly
    out = jax.block_until_ready(gpt2_block(x, params, NH, matmul_dtype=jnp.float32))
    assert out.shape == (B, T, C)
    err = jnp.max(jnp.abs(out - ref))
    assert jnp.allclose(out, ref, atol=1e-4, rtol=1e-4), f"f32 max abs err {err}"

    # bf16-fed MXU path (f32 accumulation): looser tolerance for bf16 rounding
    out_bf16 = jax.block_until_ready(
        gpt2_block(x, params, NH, matmul_dtype=jnp.bfloat16))
    err_bf = jnp.max(jnp.abs(out_bf16 - ref))
    assert err_bf < 5e-2, f"bf16 max abs err {err_bf}"

    print("KERNEL_OK")
</pallas_src>

<mosaic_0001>
module attributes {stable_mosaic.version = 11 : i64} {
  func.func @_k(%arg0: i32, %arg1: memref<8x128xf32, #tpu.memory_space<vmem>>, %arg2: memref<8x128xf32, #tpu.memory_space<vmem>>) attributes {dimension_semantics = [#tpu.dimension_semantics<arbitrary>], iteration_bounds = array<i64: 1>, scalar_prefetch = 0 : i64, scratch_operands = 0 : i64, tpu.core_type = #tpu.core_type<tc>, window_params = [{pipeline_mode = #tpu.pipeline_mode<synchronous>, transform_indices = @transform_0, window_bounds = array<i64: 8, 128>}, {pipeline_mode = #tpu.pipeline_mode<synchronous>, transform_indices = @transform_1, window_bounds = array<i64: 8, 128>}]} {
    %c0 = arith.constant 0 : index
    %c0_0 = arith.constant 0 : index
    %0 = vector.load %arg1[%c0, %c0_0] : memref<8x128xf32, #tpu.memory_space<vmem>>, vector<8x128xf32>
    %cst = arith.constant 2.000000e+00 : f32
    %1 = vector.broadcast %cst : f32 to vector<8x128xf32>
    %2 = arith.mulf %0, %1 : vector<8x128xf32>
    %c0_1 = arith.constant 0 : index
    %c0_2 = arith.constant 0 : index
    %3 = vector.load %arg2[%c0_1, %c0_2] : memref<8x128xf32, #tpu.memory_space<vmem>>, vector<8x128xf32>
    tpu.vector_store %arg2[%c0_1, %c0_2], %2 {strides = array<i32>} : memref<8x128xf32, #tpu.memory_space<vmem>>, vector<8x128xf32>,
    return
  }
  func.func @transform_0(%arg0: i32) -> (i32, i32) {
    %c0_i32 = arith.constant 0 : i32
    %c0_i32_0 = arith.constant 0 : i32
    %c0_i32_1 = arith.constant 0 : i32
    return %c0_i32, %c0_i32_0 : i32, i32
  }
  func.func @transform_1(%arg0: i32) -> (i32, i32) {
    %c0_i32 = arith.constant 0 : i32
    %c0_i32_0 = arith.constant 0 : i32
    %c0_i32_1 = arith.constant 0 : i32
    return %c0_i32, %c0_i32_0 : i32, i32
  }
}

module attributes {stable_mosaic.version = 11 : i64} {
  func.func @qkv_kernel(%arg0: i32, %arg1: i32, %arg2: memref<1x8x32xf32, #tpu.memory_space<vmem>>, %arg3: memref<1x32xf32, #tpu.memory_space<vmem>>, %arg4: memref<1x32xf32, #tpu.memory_space<vmem>>, %arg5: memref<32x96xf32, #tpu.memory_space<vmem>>, %arg6: memref<1x96xf32, #tpu.memory_space<vmem>>, %arg7: memref<1x4x8x8xf32, #tpu.memory_space<vmem>>, %arg8: memref<1x4x8x8xf32, #tpu.memory_space<vmem>>, %arg9: memref<1x4x8x8xf32, #tpu.memory_space<vmem>>) attributes {dimension_semantics = [#tpu.dimension_semantics<parallel>, #tpu.dimension_semantics<parallel>], iteration_bounds = array<i64: 2, 1>, scalar_prefetch = 0 : i64, scratch_operands = 0 : i64, tpu.core_type = #tpu.core_type<tc>, window_params = [{transform_indices = @transform_0, window_bounds = array<i64: 1, 8, 32>}, {pipeline_mode = #tpu.pipeline_mode<synchronous>, transform_indices = @transform_1, window_bounds = array<i64: 1, 32>}, {pipeline_mode = #tpu.pipeline_mode<synchronous>, transform_indices = @transform_2, window_bounds = array<i64: 1, 32>}, {pipeline_mode = #tpu.pipeline_mode<synchronous>, transform_indices = @transform_3, window_bounds = array<i64: 32, 96>}, {pipeline_mode = #tpu.pipeline_mode<synchronous>, transform_indices = @transform_4, window_bounds = array<i64: 1, 96>}, {transform_indices = @transform_5, window_bounds = array<i64: 1, 4, 8, 8>}, {transform_indices = @transform_6, window_bounds = array<i64: 1, 4, 8, 8>}, {transform_indices = @transform_7, window_bounds = array<i64: 1, 4, 8, 8>}]} {
    %c0 = arith.constant 0 : index
    %c0_0 = arith.constant 0 : index
    %c0_1 = arith.constant 0 : index
    %0 = vector.load %arg2[%c0, %c0_0, %c0_1] : memref<1x8x32xf32, #tpu.memory_space<vmem>>, vector<1x8x32xf32>
    %1 = vector.shape_cast %0 : vector<1x8x32xf32> to vector<8x32xf32>
    %c0_2 = arith.constant 0 : index
    %c0_3 = arith.constant 0 : index
    %2 = vector.load %arg3[%c0_2, %c0_3] : memref<1x32xf32, #tpu.memory_space<vmem>>, vector<1x32xf32>
    %c0_4 = arith.constant 0 : index
    %c0_5 = arith.constant 0 : index
    %3 = vector.load %arg4[%c0_4, %c0_5] : memref<1x32xf32, #tpu.memory_space<vmem>>, vector<1x32xf32>
    %cst = arith.constant dense<0.000000e+00> : vector<8xf32>
    %4 = vector.multi_reduction <add>, %1, %cst [1] : vector<8x32xf32> to vector<8xf32>
    %5 = vector.shape_cast %4 : vector<8xf32> to vector<8x1xf32>
    %cst_6 = arith.constant 3.200000e+01 : f32
    %6 = vector.broadcast %cst_6 : f32 to vector<8x1xf32>
    %7 = arith.divf %5, %6 : vector<8x1xf32>
    %8 = vector.broadcast %7 : vector<8x1xf32> to vector<8x32xf32>
    %9 = arith.subf %1, %8 : vector<8x32xf32>
    %10 = arith.mulf %9, %9 : vector<8x32xf32>
    %cst_7 = arith.constant dense<0.000000e+00> : vector<8xf32>
    %11 = vector.multi_reduction <add>, %10, %cst_7 [1] : vector<8x32xf32> to vector<8xf32>
    %12 = vector.shape_cast %11 : vector<8xf32> to vector<8x1xf32>
    %cst_8 = arith.constant 3.200000e+01 : f32
    %13 = vector.broadcast %cst_8 : f32 to vector<8x1xf32>
    %14 = arith.divf %12, %13 : vector<8x1xf32>
    %15 = vector.broadcast %7 : vector<8x1xf32> to vector<8x32xf32>
    %16 = arith.subf %1, %15 : vector<8x32xf32>
    %cst_9 = arith.constant 9.99999974E-6 : f32
    %17 = vector.broadcast %cst_9 : f32 to vector<8x1xf32>
    %18 = arith.addf %14, %17 : vector<8x1xf32>
    %19 = math.rsqrt %18 : vector<8x1xf32>
    %20 = vector.broadcast %19 : vector<8x1xf32> to vector<8x32xf32>
    %21 = arith.mulf %16, %20 : vector<8x32xf32>
    %22 = vector.broadcast %2 : vector<1x32xf32> to vector<8x32xf32>
    %23 = arith.mulf %21, %22 : vector<8x32xf32>
    %24 = vector.broadcast %3 : vector<1x32xf32> to vector<8x32xf32>
    %25 = arith.addf %23, %24 : vector<8x32xf32>
    %c0_10 = arith.constant 0 : index
    %c0_11 = arith.constant 0 : index
    %26 = vector.load %arg5[%c0_10, %c0_11] : memref<32x96xf32, #tpu.memory_space<vmem>>, vector<32x96xf32>
    %cst_12 = arith.constant dense<0.000000e+00> : vector<8x96xf32>
    %27 = tpu.matmul %25, %26, %cst_12 {dimension_numbers = #tpu.dot_dimension_numbers<[1], [0], [0], [1], [0, 0, 1, 1], [], []>} : vector<8x32xf32>, vector<32x96xf32>, vector<8x96xf32> -> vector<8x96xf32>
    %c0_13 = arith.constant 0 : index
    %c0_14 = arith.constant 0 : index
    %28 = vector.load %arg6[%c0_13, %c0_14] : memref<1x96xf32, #tpu.memory_space<vmem>>, vector<1x96xf32>
    %29 = vector.broadcast %28 : vector<1x96xf32> to vector<8x96xf32>
    %30 = arith.addf %27, %29 : vector<8x96xf32>
    %31 = vector.extract_strided_slice %30 {offsets = [0, 0], sizes = [8, 32], strides = [1, 1]} : vector<8x96xf32> to vector<8x32xf32>
    %cst_15 = arith.constant 0.353553385 : f32
    %32 = vector.broadcast %cst_15 : f32 to vector<8x32xf32>
    %33 = arith.mulf %31, %32 : vector<8x32xf32>
    %34 = vector.extract_strided_slice %30 {offsets = [0, 32], sizes = [8, 32], strides = [1, 1]} : vector<8x96xf32> to vector<8x32xf32>
    %35 = tpu.transpose %34, [1, 0] : vector<8x32xf32> -> vector<32x8xf32>
    %36 = vector.extract_strided_slice %30 {offsets = [0, 64], sizes = [8, 32], strides = [1, 1]} : vector<8x96xf32> to vector<8x32xf32>
    %37 = vector.extract_strided_slice %33 {offsets = [0, 0], sizes = [8, 8], strides = [1, 1]} : vector<8x32xf32> to vector<8x8xf32>
    %c0_16 = arith.constant 0 : index
    %c0_17 = arith.constant 0 : index
    %c0_18 = arith.constant 0 : index
    %c0_19 = arith.constant 0 : index
    %38 = vector.load %arg7[%c0_16, %c0_17, %c0_18, %c0_19] : memref<1x4x8x8xf32, #tpu.memory_space<vmem>>, vector<1x1x8x8xf32>
    %39 = vector.shape_cast %38 : vector<1x1x8x8xf32> to vector<8x8xf32>
    %40 = vector.shape_cast %37 : vector<8x8xf32> to vector<1x1x8x8xf32>
    tpu.vector_store %arg7[%c0_16, %c0_17, %c0_18, %c0_19], %40 {strides = array<i32>} : memref<1x4x8x8xf32, #tpu.memory_space<vmem>>, vector<1x1x8x8xf32>,
    %41 = vector.extract_strided_slice %35 {offsets = [0, 0], sizes = [8, 8], strides = [1, 1]} : vector<32x8xf32> to vector<8x8xf32>
    %c0_20 = arith.constant 0 : index
    %c0_21 = arith.constant 0 : index
    %c0_22 = arith.constant 0 : index
    %c0_23 = arith.constant 0 : index
    %42 = vector.load %arg8[%c0_20, %c0_21, %c0_22, %c0_23] : memref<1x4x8x8xf32, #tpu.memory_space<vmem>>, vector<1x1x8x8xf32>
    %43 = vector.shape_cast %42 : vector<1x1x8x8xf32> to vector<8x8xf32>
    %44 = vector.shape_cast %41 : vector<8x8xf32> to vector<1x1x8x8xf32>
    tpu.vector_store %arg8[%c0_20, %c0_21, %c0_22, %c0_23], %44 {strides = array<i32>} : memref<1x4x8x8xf32, #tpu.memory_space<vmem>>, vector<1x1x8x8xf32>,
    %45 = vector.extract_strided_slice %36 {offsets = [0, 0], sizes = [8, 8], strides = [1, 1]} : vector<8x32xf32> to vector<8x8xf32>
    %c0_24 = arith.constant 0 : index
    %c0_25 = arith.constant 0 : index
    %c0_26 = arith.constant 0 : index
    %c0_27 = arith.constant 0 : index
    %46 = vector.load %arg9[%c0_24, %c0_25, %c0_26, %c0_27] : memref<1x4x8x8xf32, #tpu.memory_space<vmem>>, vector<1x1x8x8xf32>
    %47 = vector.shape_cast %46 : vector<1x1x8x8xf32> to vector<8x8xf32>
    %48 = vector.shape_cast %45 : vector<8x8xf32> to vector<1x1x8x8xf32>
    tpu.vector_store %arg9[%c0_24, %c0_25, %c0_26, %c0_27], %48 {strides = array<i32>} : memref<1x4x8x8xf32, #tpu.memory_space<vmem>>, vector<1x1x8x8xf32>,
    %49 = vector.extract_strided_slice %33 {offsets = [0, 8], sizes = [8, 8], strides = [1, 1]} : vector<8x32xf32> to vector<8x8xf32>
    %c0_28 = arith.constant 0 : index
    %c1 = arith.constant 1 : index
    %c0_29 = arith.constant 0 : index
    %c0_30 = arith.constant 0 : index
    %50 = vector.load %arg7[%c0_28, %c1, %c0_29, %c0_30] : memref<1x4x8x8xf32, #tpu.memory_space<vmem>>, vector<1x1x8x8xf32>
    %51 = vector.shape_cast %50 : vector<1x1x8x8xf32> to vector<8x8xf32>
    %52 = vector.shape_cast %49 : vector<8x8xf32> to vector<1x1x8x8xf32>
    tpu.vector_store %arg7[%c0_28, %c1, %c0_29, %c0_30], %52 {strides = array<i32>} : memref<1x4x8x8xf32, #tpu.memory_space<vmem>>, vector<1x1x8x8xf32>,
    %53 = vector.extract_strided_slice %35 {offsets = [8, 0], sizes = [8, 8], strides = [1, 1]} : vector<32x8xf32> to vector<8x8xf32>
    %c0_31 = arith.constant 0 : index
    %c1_32 = arith.constant 1 : index
    %c0_33 = arith.constant 0 : index
    %c0_34 = arith.constant 0 : index
    %54 = vector.load %arg8[%c0_31, %c1_32, %c0_33, %c0_34] : memref<1x4x8x8xf32, #tpu.memory_space<vmem>>, vector<1x1x8x8xf32>
    %55 = vector.shape_cast %54 : vector<1x1x8x8xf32> to vector<8x8xf32>
    %56 = vector.shape_cast %53 : vector<8x8xf32> to vector<1x1x8x8xf32>
    tpu.vector_store %arg8[%c0_31, %c1_32, %c0_33, %c0_34], %56 {strides = array<i32>} : memref<1x4x8x8xf32, #tpu.memory_space<vmem>>, vector<1x1x8x8xf32>,
    %57 = vector.extract_strided_slice %36 {offsets = [0, 8], sizes = [8, 8], strides = [1, 1]} : vector<8x32xf32> to vector<8x8xf32>
    %c0_35 = arith.constant 0 : index
    %c1_36 = arith.constant 1 : index
    %c0_37 = arith.constant 0 : index
    %c0_38 = arith.constant 0 : index
    %58 = vector.load %arg9[%c0_35, %c1_36, %c0_37, %c0_38] : memref<1x4x8x8xf32, #tpu.memory_space<vmem>>, vector<1x1x8x8xf32>
    %59 = vector.shape_cast %58 : vector<1x1x8x8xf32> to vector<8x8xf32>
    %60 = vector.shape_cast %57 : vector<8x8xf32> to vector<1x1x8x8xf32>
    tpu.vector_store %arg9[%c0_35, %c1_36, %c0_37, %c0_38], %60 {strides = array<i32>} : memref<1x4x8x8xf32, #tpu.memory_space<vmem>>, vector<1x1x8x8xf32>,
    %61 = vector.extract_strided_slice %33 {offsets = [0, 16], sizes = [8, 8], strides = [1, 1]} : vector<8x32xf32> to vector<8x8xf32>
    %c0_39 = arith.constant 0 : index
    %c2 = arith.constant 2 : index
    %c0_40 = arith.constant 0 : index
    %c0_41 = arith.constant 0 : index
    %62 = vector.load %arg7[%c0_39, %c2, %c0_40, %c0_41] : memref<1x4x8x8xf32, #tpu.memory_space<vmem>>, vector<1x1x8x8xf32>
    %63 = vector.shape_cast %62 : vector<1x1x8x8xf32> to vector<8x8xf32>
    %64 = vector.shape_cast %61 : vector<8x8xf32> to vector<1x1x8x8xf32>
    tpu.vector_store %arg7[%c0_39, %c2, %c0_40, %c0_41], %64 {strides = array<i32>} : memref<1x4x8x8xf32, #tpu.memory_space<vmem>>, vector<1x1x8x8xf32>,
    %65 = vector.extract_strided_slice %35 {offsets = [16, 0], sizes = [8, 8], strides = [1, 1]} : vector<32x8xf32> to vector<8x8xf32>
    %c0_42 = arith.constant 0 : index
    %c2_43 = arith.constant 2 : index
    %c0_44 = arith.constant 0 : index
    %c0_45 = arith.constant 0 : index
    %66 = vector.load %arg8[%c0_42, %c2_43, %c0_44, %c0_45] : memref<1x4x8x8xf32, #tpu.memory_space<vmem>>, vector<1x1x8x8xf32>
    %67 = vector.shape_cast %66 : vector<1x1x8x8xf32> to vector<8x8xf32>
    %68 = vector.shape_cast %65 : vector<8x8xf32> to vector<1x1x8x8xf32>
    tpu.vector_store %arg8[%c0_42, %c2_43, %c0_44, %c0_45], %68 {strides = array<i32>} : memref<1x4x8x8xf32, #tpu.memory_space<vmem>>, vector<1x1x8x8xf32>,
    %69 = vector.extract_strided_slice %36 {offsets = [0, 16], sizes = [8, 8], strides = [1, 1]} : vector<8x32xf32> to vector<8x8xf32>
    %c0_46 = arith.constant 0 : index
    %c2_47 = arith.constant 2 : index
    %c0_48 = arith.constant 0 : index
    %c0_49 = arith.constant 0 : index
    %70 = vector.load %arg9[%c0_46, %c2_47, %c0_48, %c0_49] : memref<1x4x8x8xf32, #tpu.memory_space<vmem>>, vector<1x1x8x8xf32>
    %71 = vector.shape_cast %70 : vector<1x1x8x8xf32> to vector<8x8xf32>
    %72 = vector.shape_cast %69 : vector<8x8xf32> to vector<1x1x8x8xf32>
    tpu.vector_store %arg9[%c0_46, %c2_47, %c0_48, %c0_49], %72 {strides = array<i32>} : memref<1x4x8x8xf32, #tpu.memory_space<vmem>>, vector<1x1x8x8xf32>,
    %73 = vector.extract_strided_slice %33 {offsets = [0, 24], sizes = [8, 8], strides = [1, 1]} : vector<8x32xf32> to vector<8x8xf32>
    %c0_50 = arith.constant 0 : index
    %c3 = arith.constant 3 : index
    %c0_51 = arith.constant 0 : index
    %c0_52 = arith.constant 0 : index
    %74 = vector.load %arg7[%c0_50, %c3, %c0_51, %c0_52] : memref<1x4x8x8xf32, #tpu.memory_space<vmem>>, vector<1x1x8x8xf32>
    %75 = vector.shape_cast %74 : vector<1x1x8x8xf32> to vector<8x8xf32>
    %76 = vector.shape_cast %73 : vector<8x8xf32> to vector<1x1x8x8xf32>
    tpu.vector_store %arg7[%c0_50, %c3, %c0_51, %c0_52], %76 {strides = array<i32>} : memref<1x4x8x8xf32, #tpu.memory_space<vmem>>, vector<1x1x8x8xf32>,
    %77 = vector.extract_strided_slice %35 {offsets = [24, 0], sizes = [8, 8], strides = [1, 1]} : vector<32x8xf32> to vector<8x8xf32>
    %c0_53 = arith.constant 0 : index
    %c3_54 = arith.constant 3 : index
    %c0_55 = arith.constant 0 : index
    %c0_56 = arith.constant 0 : index
    %78 = vector.load %arg8[%c0_53, %c3_54, %c0_55, %c0_56] : memref<1x4x8x8xf32, #tpu.memory_space<vmem>>, vector<1x1x8x8xf32>
    %79 = vector.shape_cast %78 : vector<1x1x8x8xf32> to vector<8x8xf32>
    %80 = vector.shape_cast %77 : vector<8x8xf32> to vector<1x1x8x8xf32>
    tpu.vector_store %arg8[%c0_53, %c3_54, %c0_55, %c0_56], %80 {strides = array<i32>} : memref<1x4x8x8xf32, #tpu.memory_space<vmem>>, vector<1x1x8x8xf32>,
    %81 = vector.extract_strided_slice %36 {offsets = [0, 24], sizes = [8, 8], strides = [1, 1]} : vector<8x32xf32> to vector<8x8xf32>
    %c0_57 = arith.constant 0 : index
    %c3_58 = arith.constant 3 : index
    %c0_59 = arith.constant 0 : index
    %c0_60 = arith.constant 0 : index
    %82 = vector.load %arg9[%c0_57, %c3_58, %c0_59, %c0_60] : memref<1x4x8x8xf32, #tpu.memory_space<vmem>>, vector<1x1x8x8xf32>
    %83 = vector.shape_cast %82 : vector<1x1x8x8xf32> to vector<8x8xf32>
    %84 = vector.shape_cast %81 : vector<8x8xf32> to vector<1x1x8x8xf32>
    tpu.vector_store %arg9[%c0_57, %c3_58, %c0_59, %c0_60], %84 {strides = array<i32>} : memref<1x4x8x8xf32, #tpu.memory_space<vmem>>, vector<1x1x8x8xf32>,
    return
  }
  func.func @transform_0(%arg0: i32, %arg1: i32) -> (i32, i32, i32) {
    %c0_i32 = arith.constant 0 : i32
    %c0_i32_0 = arith.constant 0 : i32
    return %arg0, %arg1, %c0_i32 : i32, i32, i32
  }
  func.func @transform_1(%arg0: i32, %arg1: i32) -> (i32, i32) {
    %c0_i32 = arith.constant 0 : i32
    %c0_i32_0 = arith.constant 0 : i32
    %c0_i32_1 = arith.constant 0 : i32
    return %c0_i32, %c0_i32_0 : i32, i32
  }
  func.func @transform_2(%arg0: i32, %arg1: i32) -> (i32, i32) {
    %c0_i32 = arith.constant 0 : i32
    %c0_i32_0 = arith.constant 0 : i32
    %c0_i32_1 = arith.constant 0 : i32
    return %c0_i32, %c0_i32_0 : i32, i32
  }
  func.func @transform_3(%arg0: i32, %arg1: i32) -> (i32, i32) {
    %c0_i32 = arith.constant 0 : i32
    %c0_i32_0 = arith.constant 0 : i32
    %c0_i32_1 = arith.constant 0 : i32
    return %c0_i32, %c0_i32_0 : i32, i32
  }
  func.func @transform_4(%arg0: i32, %arg1: i32) -> (i32, i32) {
    %c0_i32 = arith.constant 0 : i32
    %c0_i32_0 = arith.constant 0 : i32
    %c0_i32_1 = arith.constant 0 : i32
    return %c0_i32, %c0_i32_0 : i32, i32
  }
  func.func @transform_5(%arg0: i32, %arg1: i32) -> (i32, i32, i32, i32) {
    %c0_i32 = arith.constant 0 : i32
    %c0_i32_0 = arith.constant 0 : i32
    %c0_i32_1 = arith.constant 0 : i32
    return %arg0, %c0_i32, %arg1, %c0_i32_0 : i32, i32, i32, i32
  }
  func.func @transform_6(%arg0: i32, %arg1: i32) -> (i32, i32, i32, i32) {
    %c0_i32 = arith.constant 0 : i32
    %c0_i32_0 = arith.constant 0 : i32
    %c0_i32_1 = arith.constant 0 : i32
    return %arg0, %c0_i32, %c0_i32_0, %arg1 : i32, i32, i32, i32
  }
  func.func @transform_7(%arg0: i32, %arg1: i32) -> (i32, i32, i32, i32) {
    %c0_i32 = arith.constant 0 : i32
    %c0_i32_0 = arith.constant 0 : i32
    %c0_i32_1 = arith.constant 0 : i32
    return %arg0, %c0_i32, %arg1, %c0_i32_0 : i32, i32, i32, i32
  }
}

</mosaic_0001>

<llo_original>
// kernel: tpu_custom_call.1
$region0: #{tpu_custom_call.1}
  #allocation0 [shape = 'u32[]', space=smem, size = 0x4, offset = 0x4, fixed_abs, tag = 'smem constant byte address 0x4 - core index']
  #allocation1 [shape = 'u32[144,128]{1,0:T(1,128)}', space=vmem, size = 0x12000, scoped, tag = 'internal scratch']
  %s0 = inlined_call_operand.hbm [shape: f32[8,128], index: 0, kind: input, shape index: {}]
  %s1 = inlined_call_operand.hbm [shape: f32[8,128], index: 1, kind: output, shape index: {}]
  %s2 = sld [smem:[#allocation0]]
  $region18: #{tpu_custom_call.1} parent=0
    _
  %s4 = ssub.s32 1, %s2
  %s5 = scalar_select 0, %s4, %s2
  $region1: #{tpu_custom_call.1} parent=0
    #allocation2 [shape = 'u8[4096]{0}', space=vmem, size = 0x1000, scoped, tag = 'input window, operand 0, single buffered']
    #allocation3 [shape = 's32[1]{0}', space=sflag, size = 0x4, scoped, tag = 'scoped memory for tpu_custom_call.1']
    #allocation4 [shape = 's32[1]{0}', space=sflag, size = 0x4, scoped, tag = 'scoped memory for tpu_custom_call.1']
    #allocation5 [shape = 'u8[4096]{0}', space=vmem, size = 0x1000, scoped, tag = 'output window, operand 0, single buffered']
    %6 = vsyncpa [#allocation3], 0
    %7 = vsyncpa [#allocation4], 0
    // Predicated region
    $region2: #{tpu_custom_call.1} parent=1 // pred_check
      _
    $region3: #{tpu_custom_call.1} parent=1 // pred_check_branch
      %9 = sbr.rel (0) target = $region5
    $region4: #{tpu_custom_call.1} parent=1 // pred_region
      %s11 = ssub.s32 128, 128
      %12 = vsyncadd [#allocation3], %s11
      %s14 = sshll.u32 [#allocation2], 4
      %s15 = int_to_ptr.vmem [resolvable:$true] %s14
      %17 = dma.hbm_to_vmem [thread:$0]  %s0, 128, %s15, [#allocation3]
    $region5: #{tpu_custom_call.1} parent=1 // pred_fallthru
      _
    // Predicated region
    $region6: #{tpu_custom_call.1} parent=1 // pred_check
      _
    $region7: #{tpu_custom_call.1} parent=1 // pred_check_branch
      %19 = sbr.rel (0) target = $region9
    $region8: #{tpu_custom_call.1} parent=1 // pred_region
      %20 = dma.done [#allocation3], 128
    $region9: #{tpu_custom_call.1} parent=1 // pred_fallthru
      _
    %v21 = vld [vmem:[#allocation2] sm:$0xff]
    %v22 = vmul.f32 %v21, 2.0
    %23 = vst [vmem:[#allocation5] sm:$0xff] %v22
    // Predicated region
    $region10: #{tpu_custom_call.1} parent=1 // pred_check
      _
    $region11: #{tpu_custom_call.1} parent=1 // pred_check_branch
      %25 = sbr.rel (0) target = $region13
    $region12: #{tpu_custom_call.1} parent=1 // pred_region
      %s27 = ssub.s32 128, 128
      %28 = vsyncadd [#allocation4], %s27
      %s30 = sshll.u32 [#allocation5], 4
      %s31 = int_to_ptr.vmem [resolvable:$true] %s30
      %33 = dma.vmem_to_hbm [thread:$0]  %s31, 128, %s1, [#allocation4]
    $region13: #{tpu_custom_call.1} parent=1 // pred_fallthru
      _
    // Predicated region
    $region14: #{tpu_custom_call.1} parent=1 // pred_check
      _
    $region15: #{tpu_custom_call.1} parent=1 // pred_check_branch
      %35 = sbr.rel (0) target = $region17
    $region16: #{tpu_custom_call.1} parent=1 // pred_region
      %36 = dma.done [#allocation4], 128
    $region17: #{tpu_custom_call.1} parent=1 // pred_fallthru
      _
    %37 = vsyncpa [#allocation3], 1
    %38 = vsyncpa [#allocation4], 1

// kernel: tpu_custom_call.1
$region0: #{tpu_custom_call.1}
  #allocation0 [shape = 'u32[]', space=smem, size = 0x4, offset = 0x4, fixed_abs, tag = 'smem constant byte address 0x4 - core index']
  #allocation1 [shape = 'u32[144,128]{1,0:T(1,128)}', space=vmem, size = 0x12000, scoped, tag = 'internal scratch']
  %s0 = inlined_call_operand.hbm [shape: f32[2,8,32], index: 0, kind: input, shape index: {}]
  %s1 = inlined_call_operand.vmem [shape: f32[1,32], index: 1, kind: input, shape index: {}]
  %s2 = inlined_call_operand.vmem [shape: f32[1,32], index: 2, kind: input, shape index: {}]
  %s3 = inlined_call_operand.hbm [shape: f32[32,96], index: 3, kind: input, shape index: {}]
  %s4 = inlined_call_operand.vmem [shape: f32[1,96], index: 4, kind: input, shape index: {}]
  %s5 = inlined_call_operand.hbm [shape: f32[2,4,8,8], index: 5, kind: output, shape index: {0}]
  %s6 = inlined_call_operand.hbm [shape: f32[2,4,8,8], index: 6, kind: output, shape index: {1}]
  %s7 = inlined_call_operand.hbm [shape: f32[2,4,8,8], index: 7, kind: output, shape index: {2}]
  %8 = xla_tuple %s5, %s6, %s7
  %s9 = sld [smem:[#allocation0]]
  $region77: #{tpu_custom_call.1} parent=0
    _
  %s11 = ssub.s32 1, %s9
  %s12 = scalar_select 0, %s11, %s9
  $region1: #{tpu_custom_call.1} parent=0
    #allocation2 [shape = 'u8[8192]{0}', space=vmem, size = 0x2000, scoped, tag = 'input window, operand 0']
    #allocation3 [shape = 's32[2]{0}', space=sflag, size = 0x8, scoped, tag = 'scoped memory for tpu_custom_call.1']
    #allocation4 [shape = 's32[2]{0}', space=sflag, size = 0x8, scoped, tag = 'scoped memory for tpu_custom_call.1']
    #allocation5 [shape = 'u8[16384]{0}', space=vmem, size = 0x4000, scoped, tag = 'input window, operand 3, single buffered']
    #allocation6 [shape = 's32[1]{0}', space=sflag, size = 0x4, scoped, tag = 'scoped memory for tpu_custom_call.1']
    #allocation7 [shape = 'u8[32768]{0}', space=vmem, size = 0x8000, scoped, tag = 'output window, operand 0']
    #allocation8 [shape = 'u8[32768]{0}', space=vmem, size = 0x8000, scoped, tag = 'output window, operand 1']
    #allocation9 [shape = 's32[2]{0}', space=sflag, size = 0x8, scoped, tag = 'scoped memory for tpu_custom_call.1']
    #allocation10 [shape = 'u8[32768]{0}', space=vmem, size = 0x8000, scoped, tag = 'output window, operand 2']
    %13 = vsyncpa [#allocation3], 0
    %s14 = scalar_lea.sflag [#allocation3], 1
    %15 = vsyncpa %s14, 0
    %16 = vsyncpa [#allocation6], 0
    %17 = vsyncpa [#allocation4], 0
    %s18 = scalar_lea.sflag [#allocation4], 1
    %19 = vsyncpa %s18, 0
    %20 = vsyncpa [#allocation9], 0
    %s21 = scalar_lea.sflag [#allocation9], 1
    %22 = vsyncpa %s21, 0
    loop: start=0, step=1, limit=4
    $region2: #{tpu_custom_call.1} parent=1 // loop_pre_header
      _
    $region3: #{tpu_custom_call.1} parent=1 // loop_header
      %s24 = sphi 0, %s28
      %p25 = scmp.ge.s32.totalorder %s24, 4
      %s31 = sphi 0, %s43
      %s32 = sphi 0, %s39
      %s33 = sphi 0, %s31
      %s34 = sphi 0, %s32
      %s35 = sphi 0, %s33
      %s36 = sphi 0, %s34
      %s48 = sphi 0, %s50
      %s51 = sphi 0, %s48
      %s52 = sphi 0, %s51
      %s68 = sphi 0, %s52
      %s72 = sphi 0, %s72
      %s74 = sphi 0, %s72
      %s75 = sphi 0, %s74
      %s89 = sphi 0, %s75
      %s93 = sphi 0, %s93
      %s95 = sphi 0, %s93
      %s96 = sphi 0, %s95
      %s110 = sphi 0, %s96
      %s114 = sphi 0, %s114
      %s116 = sphi 0, %s114
      %s117 = sphi 0, %s116
      %s131 = sphi 0, %s117
      %s135 = sphi 0, %s135
      %s137 = sphi 0, %s135
      %s138 = sphi 0, %s137
      %s152 = sphi 0, %s138
      %s160 = sphi 0, %s162
      %s163 = sphi 0, %s160
      %s164 = sphi 0, %s163
      %s180 = sphi 0, %s164
      %s188 = sphi 0, %s190
      %s191 = sphi 0, %s188
      %s192 = sphi 0, %s191
      %s208 = sphi 0, %s192
      %s216 = sphi 0, %s218
      %s219 = sphi 0, %s216
      %s220 = sphi 0, %s219
      %s236 = sphi 0, %s220
    $region4: #{tpu_custom_call.1} parent=1 // loop_header_branch
      %27 = sbr.rel (%p25) target = $region8
    $region5: #{tpu_custom_call.1} parent=1 // loop_body
      %s29 = ssub.s32 %s24, 1
      %s30 = ssub.s32 %s24, 2
      %s37 = sadd.s32 1, %s32
      %p38 = scmp.ge.s32.totalorder %s37, 1
      %s39 = scalar_select %p38, 0, %s37
      %s40 = sadd.s32 1, %s31
      %s41 = scalar_select %p38, %s40, %s31
      %p42 = scmp.ge.s32.totalorder %s41, 2
      %s43 = scalar_select %p42, 0, %s41
      %s44 = ssub.s32 %s31, %s43
      %s45 = ssub.s32 %s32, %s39
      %s46 = sor.u32 %s44, %s45
      %p47 = scmp.eq.s32.totalorder %s46, 0
      %s49 = sadd.s32 %s48, 1
      %s50 = scalar_select %p47, %s48, %s49
      %p53 = pneg %p47
      %p54 = scmp.eq.s32.totalorder %s24, 1
      %p55 = por %p53, %p54
      %p56 = scmp.ne.s32.totalorder %s48, %s51
      %p57 = scmp.eq.s32.totalorder %s24, 0
      %p58 = por %p56, %p57
      %p59 = scmp.ne.s32.totalorder %s48, %s51
      %p60 = scmp.eq.s32.totalorder %s29, 1
      %p61 = por %p59, %p60
      %p62 = scmp.ne.s32.totalorder %s51, %s52
      %p63 = scmp.eq.s32.totalorder %s29, 0
      %p64 = por %p62, %p63
      %p65 = scmp.ne.s32.totalorder %s51, %s52
      %p66 = scmp.eq.s32.totalorder %s30, 1
      %p67 = por %p65, %p66
      %p69 = scmp.ne.s32.totalorder %s52, %s68
      %p70 = scmp.eq.s32.totalorder %s30, 0
      %p71 = por %p69, %p70
      %s73 = sadd.s32 %s72, 1
      %p76 = scmp.eq.s32.totalorder %s24, 1
      %p77 = scmp.ne.s32.totalorder %s72, %s74
      %p78 = scmp.eq.s32.totalorder %s24, 0
      %p79 = por %p77, %p78
      %p80 = scmp.ne.s32.totalorder %s72, %s74
      %p81 = scmp.eq.s32.totalorder %s29, 1
      %p82 = por %p80, %p81
      %p83 = scmp.ne.s32.totalorder %s74, %s75
      %p84 = scmp.eq.s32.totalorder %s29, 0
      %p85 = por %p83, %p84
      %p86 = scmp.ne.s32.totalorder %s74, %s75
      %p87 = scmp.eq.s32.totalorder %s30, 1
      %p88 = por %p86, %p87
      %p90 = scmp.ne.s32.totalorder %s75, %s89
      %p91 = scmp.eq.s32.totalorder %s30, 0
      %p92 = por %p90, %p91
      %s94 = sadd.s32 %s93, 1
      %p97 = scmp.eq.s32.totalorder %s24, 1
      %p98 = scmp.ne.s32.totalorder %s93, %s95
      %p99 = scmp.eq.s32.totalorder %s24, 0
      %p100 = por %p98, %p99
      %p101 = scmp.ne.s32.totalorder %s93, %s95
      %p102 = scmp.eq.s32.totalorder %s29, 1
      %p103 = por %p101, %p102
      %p104 = scmp.ne.s32.totalorder %s95, %s96
      %p105 = scmp.eq.s32.totalorder %s29, 0
      %p106 = por %p104, %p105
      %p107 = scmp.ne.s32.totalorder %s95, %s96
      %p108 = scmp.eq.s32.totalorder %s30, 1
      %p109 = por %p107, %p108
      %p111 = scmp.ne.s32.totalorder %s96, %s110
      %p112 = scmp.eq.s32.totalorder %s30, 0
      %p113 = por %p111, %p112
      %s115 = sadd.s32 %s114, 1
      %p118 = scmp.eq.s32.totalorder %s24, 1
      %p119 = scmp.ne.s32.totalorder %s114, %s116
      %p120 = scmp.eq.s32.totalorder %s24, 0
      %p121 = por %p119, %p120
      %p122 = scmp.ne.s32.totalorder %s114, %s116
      %p123 = scmp.eq.s32.totalorder %s29, 1
      %p124 = por %p122, %p123
      %p125 = scmp.ne.s32.totalorder %s116, %s117
      %p126 = scmp.eq.s32.totalorder %s29, 0
      %p127 = por %p125, %p126
      %p128 = scmp.ne.s32.totalorder %s116, %s117
      %p129 = scmp.eq.s32.totalorder %s30, 1
      %p130 = por %p128, %p129
      %p132 = scmp.ne.s32.totalorder %s117, %s131
      %p133 = scmp.eq.s32.totalorder %s30, 0
      %p134 = por %p132, %p133
      %s136 = sadd.s32 %s135, 1
      %p139 = scmp.eq.s32.totalorder %s24, 1
      %p140 = scmp.ne.s32.totalorder %s135, %s137
      %p141 = scmp.eq.s32.totalorder %s24, 0
      %p142 = por %p140, %p141
      %p143 = scmp.ne.s32.totalorder %s135, %s137
      %p144 = scmp.eq.s32.totalorder %s29, 1
      %p145 = por %p143, %p144
      %p146 = scmp.ne.s32.totalorder %s137, %s138
      %p147 = scmp.eq.s32.totalorder %s29, 0
      %p148 = por %p146, %p147
      %p149 = scmp.ne.s32.totalorder %s137, %s138
      %p150 = scmp.eq.s32.totalorder %s30, 1
      %p151 = por %p149, %p150
      %p153 = scmp.ne.s32.totalorder %s138, %s152
      %p154 = scmp.eq.s32.totalorder %s30, 0
      %p155 = por %p153, %p154
      %s156 = ssub.s32 %s31, %s43
      %s157 = ssub.s32 %s32, %s39
      %s158 = sor.u32 %s156, %s157
      %p159 = scmp.eq.s32.totalorder %s158, 0
      %s161 = sadd.s32 %s160, 1
      %s162 = scalar_select %p159, %s160, %s161
      %p165 = pneg %p159
      %p166 = scmp.eq.s32.totalorder %s24, 1
      %p167 = por %p165, %p166
      %p168 = scmp.ne.s32.totalorder %s160, %s163
      %p169 = scmp.eq.s32.totalorder %s24, 0
      %p170 = por %p168, %p169
      %p171 = scmp.ne.s32.totalorder %s160, %s163
      %p172 = scmp.eq.s32.totalorder %s29, 1
      %p173 = por %p171, %p172
      %p174 = scmp.ne.s32.totalorder %s163, %s164
      %p175 = scmp.eq.s32.totalorder %s29, 0
      %p176 = por %p174, %p175
      %p177 = scmp.ne.s32.totalorder %s163, %s164
      %p178 = scmp.eq.s32.totalorder %s30, 1
      %p179 = por %p177, %p178
      %p181 = scmp.ne.s32.totalorder %s164, %s180
      %p182 = scmp.eq.s32.totalorder %s30, 0
      %p183 = por %p181, %p182
      %s184 = ssub.s32 %s31, %s43
      %s185 = ssub.s32 %s32, %s39
      %s186 = sor.u32 %s184, %s185
      %p187 = scmp.eq.s32.totalorder %s186, 0
      %s189 = sadd.s32 %s188, 1
      %s190 = scalar_select %p187, %s188, %s189
      %p193 = pneg %p187
      %p194 = scmp.eq.s32.totalorder %s24, 1
      %p195 = por %p193, %p194
      %p196 = scmp.ne.s32.totalorder %s188, %s191
      %p197 = scmp.eq.s32.totalorder %s24, 0
      %p198 = por %p196, %p197
      %p199 = scmp.ne.s32.totalorder %s188, %s191
      %p200 = scmp.eq.s32.totalorder %s29, 1
      %p201 = por %p199, %p200
      %p202 = scmp.ne.s32.totalorder %s191, %s192
      %p203 = scmp.eq.s32.totalorder %s29, 0
      %p204 = por %p202, %p203
      %p205 = scmp.ne.s32.totalorder %s191, %s192
      %p206 = scmp.eq.s32.totalorder %s30, 1
      %p207 = por %p205, %p206
      %p209 = scmp.ne.s32.totalorder %s192, %s208
      %p210 = scmp.eq.s32.totalorder %s30, 0
      %p211 = por %p209, %p210
      %s212 = ssub.s32 %s31, %s43
      %s213 = ssub.s32 %s32, %s39
      %s214 = sor.u32 %s212, %s213
      %p215 = scmp.eq.s32.totalorder %s214, 0
      %s217 = sadd.s32 %s216, 1
      %s218 = scalar_select %p215, %s216, %s217
      %p221 = pneg %p215
      %p222 = scmp.eq.s32.totalorder %s24, 1
      %p223 = por %p221, %p222
      %p224 = scmp.ne.s32.totalorder %s216, %s219
      %p225 = scmp.eq.s32.totalorder %s24, 0
      %p226 = por %p224, %p225
      %p227 = scmp.ne.s32.totalorder %s216, %s219
      %p228 = scmp.eq.s32.totalorder %s29, 1
      %p229 = por %p227, %p228
      %p230 = scmp.ne.s32.totalorder %s219, %s220
      %p231 = scmp.eq.s32.totalorder %s29, 0
      %p232 = por %p230, %p231
      %p233 = scmp.ne.s32.totalorder %s219, %s220
      %p234 = scmp.eq.s32.totalorder %s30, 1
      %p235 = por %p233, %p234
      %p237 = scmp.ne.s32.totalorder %s220, %s236
      %p238 = scmp.eq.s32.totalorder %s30, 0
      %p239 = por %p237, %p238
      %p240 = scmp.le.s32.totalorder 1, %s24
      %p241 = scmp.lt.s32.totalorder %s24, 3
      %p242 = pnand %p240, %p241
      %p243 = pneg %p242
      // Predicated region
      $region9: #{tpu_custom_call.1} parent=5 // pred_check
        _
      $region10: #{tpu_custom_call.1} parent=5 // pred_check_branch
        %245 = sbr.rel (%p242) target = $region12
      $region11: #{tpu_custom_call.1} parent=5 // pred_region
        %s246 = ssub.s32 %s24, 1
        // Predicated region
        $region13: #{tpu_custom_call.1} parent=11 // pred_check
          %p247 = pneg %p85
        $region14: #{tpu_custom_call.1} parent=11 // pred_check_branch
          %249 = sbr.rel (%p247) target = $region16
        $region15: #{tpu_custom_call.1} parent=11 // pred_region
          _
        $region16: #{tpu_custom_call.1} parent=11 // pred_fallthru
          _
        // Predicated region
        $region17: #{tpu_custom_call.1} parent=11 // pred_check
          %p250 = pneg %p106
        $region18: #{tpu_custom_call.1} parent=11 // pred_check_branch
          %252 = sbr.rel (%p250) target = $region20
        $region19: #{tpu_custom_call.1} parent=11 // pred_region
          _
        $region20: #{tpu_custom_call.1} parent=11 // pred_fallthru
          _
        // Predicated region
        $region21: #{tpu_custom_call.1} parent=11 // pred_check
          %p253 = pneg %p127
        $region22: #{tpu_custom_call.1} parent=11 // pred_check_branch
          %255 = sbr.rel (%p253) target = $region24
        $region23: #{tpu_custom_call.1} parent=11 // pred_region
          %s257 = ssub.s32 512, 512
          %258 = vsyncadd [#allocation6], %s257
          %s259 = sshll.u32 [#allocation5], 4
          %s260 = int_to_ptr.vmem [resolvable:$true] %s259
          %265 = dma.hbm_to_vmem [thread:$0]  %s3, 512, %s260, [#allocation6], 128, 128, 8
        $region24: #{tpu_custom_call.1} parent=11 // pred_fallthru
          _
        // Predicated region
        $region25: #{tpu_custom_call.1} parent=11 // pred_check
          %p266 = pneg %p148
        $region26: #{tpu_custom_call.1} parent=11 // pred_check_branch
          %268 = sbr.rel (%p266) target = $region28
        $region27: #{tpu_custom_call.1} parent=11 // pred_region
          _
        $region28: #{tpu_custom_call.1} parent=11 // pred_fallthru
          _
      $region12: #{tpu_custom_call.1} parent=5 // pred_fallthru
        _
      %p269 = scmp.lt.s32.totalorder %s24, 2
      // Predicated region
      $region29: #{tpu_custom_call.1} parent=5 // pred_check
        %p270 = pneg %p269
      $region30: #{tpu_custom_call.1} parent=5 // pred_check_branch
        %272 = sbr.rel (%p270) target = $region32
      $region31: #{tpu_custom_call.1} parent=5 // pred_region
        // Predicated region
        $region33: #{tpu_custom_call.1} parent=31 // pred_check
          %p273 = pneg %p58
        $region34: #{tpu_custom_call.1} parent=31 // pred_check_branch
          %275 = sbr.rel (%p273) target = $region36
        $region35: #{tpu_custom_call.1} parent=31 // pred_region
          %s276 = sand.u32 %s48, 1
          %s277 = scalar_lea.sflag [#allocation3], %s276
          %s278 = sand.u32 %s48, 1
          %s279 = smul.addr %s278, 8
          %s280 = scalar_lea.vmem [#allocation2], %s279
          %s282 = ssub.s32 128, 128
          %283 = vsyncadd %s277, %s282
          %s284 = sadd.s32 %s32, %s31
          %s285 = smul.addr %s284, 128
          %s286 = scalar_lea.hbm %s0, %s285
          %s288 = sshll.u32 %s280, 4
          %s289 = int_to_ptr.vmem [resolvable:$true] %s288
          %291 = dma.hbm_to_vmem [thread:$0]  %s286, 128, %s289, %s277
        $region36: #{tpu_custom_call.1} parent=31 // pred_fallthru
          _
      $region32: #{tpu_custom_call.1} parent=5 // pred_fallthru
        _
      %p292 = scmp.le.s32.totalorder 1, %s24
      %p293 = scmp.lt.s32.totalorder %s24, 3
      %p294 = pnand %p292, %p293
      %p295 = pneg %p294
      // Predicated region
      $region37: #{tpu_custom_call.1} parent=5 // pred_check
        _
      $region38: #{tpu_custom_call.1} parent=5 // pred_check_branch
        %297 = sbr.rel (%p294) target = $region40
      $region39: #{tpu_custom_call.1} parent=5 // pred_region
        %s298 = ssub.s32 %s24, 1
        %s299 = sand.u32 %s51, 1
        %s300 = scalar_lea.sflag [#allocation3], %s299
        %s301 = sand.u32 %s51, 1
        %s302 = smul.addr %s301, 8
        %s303 = scalar_lea.vmem [#allocation2], %s302
        // Predicated region
        $region41: #{tpu_custom_call.1} parent=39 // pred_check
          %p304 = pneg %p64
        $region42: #{tpu_custom_call.1} parent=39 // pred_check_branch
          %306 = sbr.rel (%p304) target = $region44
        $region43: #{tpu_custom_call.1} parent=39 // pred_region
          %307 = dma.done %s300, 128
        $region44: #{tpu_custom_call.1} parent=39 // pred_fallthru
          _
        // Predicated region
        $region45: #{tpu_custom_call.1} parent=39 // pred_check
          %p308 = pneg %p127
        $region46: #{tpu_custom_call.1} parent=39 // pred_check_branch
          %310 = sbr.rel (%p308) target = $region48
        $region47: #{tpu_custom_call.1} parent=39 // pred_region
          %311 = dma.done [#allocation6], 512
        $region48: #{tpu_custom_call.1} parent=39 // pred_fallthru
          _
        %s312 = sand.u32 %s51, 1
        %s313 = scalar_lea.sflag [#allocation3], %s312
        %s314 = sand.u32 %s51, 1
        %s315 = smul.addr %s314, 8
        %s316 = scalar_lea.vmem [#allocation2], %s315
        %p317 = pneg %p64
        %p318 = pneg %p61
        %p319 = pneg %p85
        %p320 = pneg %p82
        %p321 = pneg %p106
        %p322 = pneg %p103
        %p323 = pneg %p127
        %p324 = pneg %p124
        %p325 = pneg %p148
        %p326 = pneg %p145
        %p327 = pneg %p176
        %p328 = pneg %p173
        %s329 = sand.u32 %s163, 1
        %s330 = scalar_lea.sflag [#allocation4], %s329
        %s331 = sand.u32 %s163, 1
        %s332 = smul.addr %s331, 32
        %s333 = scalar_lea.vmem [#allocation7], %s332
        %p334 = pneg %p204
        %p335 = pneg %p201
        %s336 = sand.u32 %s29, 1
        %s337 = scalar_lea.sflag [#allocation9], %s336
        %s338 = sand.u32 %s191, 1
        %s339 = smul.addr %s338, 32
        %s340 = scalar_lea.vmem [#allocation8], %s339
        %p341 = pneg %p232
        %p342 = pneg %p229
        %s343 = sand.u32 %s29, 1
        %s344 = scalar_lea.sflag [#allocation9], %s343
        %s345 = sand.u32 %s219, 1
        %s346 = smul.addr %s345, 32
        %s347 = scalar_lea.vmem [#allocation10], %s346
        %v348 = vld [vmem:[%s303] sm:$0xff]
        %v349 = vld [vmem:[%s1] sm:$0x1]
        %v350 = vld [vmem:[%s2] sm:$0x1]
        %vm351 = vcmask 261120
        %v352 = vsel %vm351, %v348, 0.0
        %353 = vadd.xlane.f32.xlu0 %v352
        %v354 = vpop.xlane.xlu0 %353
        %v355 = vrcp.pop 32.0
        %v356 = vmul.f32 %v354, %v355
        %v357 = vsub.f32 %v348, %v356
        %v358 = vmul.f32 %v357, %v357
        %v359 = vsel %vm351, %v358, 0.0
        %360 = vadd.xlane.f32.xlu0 %v359
        %v361 = vpop.xlane.xlu0 %360
        %v362 = vmul.f32 %v361, %v355
        %v363 = vadd.f32 %v362, 1e-05
        %v364 = vrsqrt.pop %v363
        %v365 = vmul.f32 %v357, %v364
        %v367 = vlaneseq
        %v368 = vshrl.u32 %v367, 7
        %v369 = vsub.s32 0, %v368
        %v370 = vrot.slane %v349, %v369
        %v372 = vmul.f32 %v365, %v370
        %v374 = vlaneseq
        %v375 = vshrl.u32 %v374, 7
        %v376 = vsub.s32 0, %v375
        %v377 = vrot.slane %v350, %v376
        %v379 = vadd.f32 %v372, %v377
        %v380 = vld [vmem:[#allocation5] sm:$0xff]
        %v381 = vld [vmem:[#allocation5 + $0x8] sm:$0xff]
        %v382 = vld [vmem:[#allocation5 + $0x10] sm:$0xff]
        %v383 = vld [vmem:[#allocation5 + $0x18] sm:$0xff]
        %v384 = vld [vmem:[%s4] sm:$0x1]
        %v386 = vlaneseq
        %v387 = vshrl.u32 %v386, 7
        %v388 = vsub.s32 0, %v387
        %v389 = vrot.slane %v384, %v388
        %v392 = vsel %vm351, %v379, 0
        %394 = vmatprep.subr.mxu0 0.0
        %395 = vmatpush1.msra.mxu0 %v380
        %396 = vmatprep.subr.mxu0 0.0
        %397 = vmatpush1.msra.mxu0 %v381
        %398 = vmatprep.subr.mxu0 0.0
        %399 = vmatpush1.msra.mxu0 %v382
        %400 = vmatprep.subr.mxu0 0.0
        %401 = vmatpush1.msra.mxu0 %v383
        %402 = vmatprep.subr.mxu0 0.0
        %403 = vmatpush1.msra.mxu0 0.0
        %404 = vmatprep.subr.mxu0 0.0
        %405 = vmatpush1.msra.mxu0 0.0
        %406 = vmatprep.subr.mxu0 0.0
        %407 = vmatpush1.msra.mxu0 0.0
        %408 = vmatprep.subr.mxu0 0.0
        %409 = vmatpush1.msra.mxu0 0.0
        %410 = vmatprep.subr.mxu0 0.0
        %411 = vmatpush1.msra.mxu0 0.0
        %412 = vmatprep.subr.mxu0 0.0
        %413 = vmatpush1.msra.mxu0 0.0
        %414 = vmatprep.subr.mxu0 0.0
        %415 = vmatpush1.msra.mxu0 0.0
        %416 = vmatprep.subr.mxu0 0.0
        %417 = vmatpush1.msra.mxu0 0.0
        %418 = vmatprep.subr.mxu0 0.0
        %419 = vmatpush1.msra.mxu0 0.0
        %420 = vmatprep.subr.mxu0 0.0
        %421 = vmatpush1.msra.mxu0 0.0
        %422 = vmatprep.subr.mxu0 0.0
        %423 = vmatpush1.msra.mxu0 0.0
        %424 = vmatprep.subr.mxu0 0.0
        %425 = vmatpush1.msra.mxu0 0.0
        %426 = vmatprep.subr.mxu0 0.0
        %427 = vmatpush1.msra.mxu0 0.0
        %428 = vmatprep.subr.mxu0 0.0
        %429 = vmatpush1.msra.mxu0 0.0
        %430 = vmatprep.subr.mxu0 0.0
        %431 = vmatpush1.msra.mxu0 0.0
        %432 = vmatprep.subr.mxu0 0.0
        %433 = vmatpush1.msra.mxu0 0.0
        %434 = vmatprep.subr.mxu0 0.0
        %435 = vmatpush1.msra.mxu0 0.0
        %436 = vmatprep.subr.mxu0 0.0
        %437 = vmatpush1.msra.mxu0 0.0
        %438 = vmatprep.subr.mxu0 0.0
        %439 = vmatpush1.msra.mxu0 0.0
        %440 = vmatprep.subr.mxu0 0.0
        %441 = vmatpush1.msra.mxu0 0.0
        %442 = vmatprep.subr.mxu0 0.0
        %443 = vmatpush1.msra.mxu0 0.0
        %444 = vmatprep.subr.mxu0 0.0
        %445 = vmatpush1.msra.mxu0 0.0
        %446 = vmatprep.subr.mxu0 0.0
        %447 = vmatpush1.msra.mxu0 0.0
        %448 = vmatprep.subr.mxu0 0.0
        %449 = vmatpush1.msra.mxu0 0.0
        %450 = vmatprep.subr.mxu0 0.0
        %451 = vmatpush1.msra.mxu0 0.0
        %452 = vmatprep.subr.mxu0 0.0
        %453 = vmatpush1.msra.mxu0 0.0
        %454 = vmatprep.subr.mxu0 0.0
        %455 = vmatpush1.msra.mxu0 0.0
        %456 = vmatprep.subr.mxu0 0.0
        %457 = vmatpush1.msra.mxu0 0.0
        %458 = vmatprep.mubr.f32.mxu0 0.0
        %459 = vmatmul.mubr.f32.gmra.mrb[0].mxu0 %v392
        %v460 = vpop.f32.mrb[0].mxu0
        %v461 = vadd.f32 %v389, %v460
        %v462 = vpop.f32.mrb[0].mxu0
        %463 = vdwg.mxu0
        %v464 = vmul.f32 %v461, 0.35355338
        %466 = vrot.lane.b32.xlu0 %v461, 96
        %v467 = vpop.permute.xlu0 %466
        %469 = vxpose.xlu0.b32.start [1/16] %v467, 128
        %470 = vxpose.xlu0.b32.cont [2/16] 0.0, 128
        %471 = vxpose.xlu0.b32.cont [3/16] 0.0, 128
        %472 = vxpose.xlu0.b32.cont [4/16] 0.0, 128
        %473 = vxpose.xlu0.b32.cont [5/16] 0.0, 128
        %474 = vxpose.xlu0.b32.cont [6/16] 0.0, 128
        %475 = vxpose.xlu0.b32.cont [7/16] 0.0, 128
        %476 = vxpose.xlu0.b32.cont [8/16] 0.0, 128
        %477 = vxpose.xlu0.b32.cont [9/16] 0.0, 128
        %478 = vxpose.xlu0.b32.cont [10/16] 0.0, 128
        %479 = vxpose.xlu0.b32.cont [11/16] 0.0, 128
        %480 = vxpose.xlu0.b32.cont [12/16] 0.0, 128
        %481 = vxpose.xlu0.b32.cont [13/16] 0.0, 128
        %482 = vxpose.xlu0.b32.cont [14/16] 0.0, 128
        %483 = vxpose.xlu0.b32.cont [15/16] 0.0, 128
        %484 = vxpose.xlu0.b32.end [16/16] 0.0, 128
        %v485 = vpop.trf.xlu0
        %v486 = vpop.trf.xlu0
        %v487 = vpop.trf.xlu0
        %v488 = vpop.trf.xlu0
        %v489 = vpop.trf.xlu0
        %v490 = vpop.trf.xlu0
        %v491 = vpop.trf.xlu0
        %v492 = vpop.trf.xlu0
        %v493 = vpop.trf.xlu0
        %v494 = vpop.trf.xlu0
        %v495 = vpop.trf.xlu0
        %v496 = vpop.trf.xlu0
        %v497 = vpop.trf.xlu0
        %v498 = vpop.trf.xlu0
        %v499 = vpop.trf.xlu0
        %v500 = vpop.trf.xlu0
        %vm501 = vcmask 64512
        %502 = vst.msk [vmem:[%s333] sm:$0xff] %vm501, %v464
        %503 = vst.msk [vmem:[%s340] sm:$0xff] %vm501, %v485
        %504 = vrot.lane.b32.xlu0 %v461, 64
        %v505 = vpop.permute.xlu0 %504
        %507 = vst.msk [vmem:[%s347] sm:$0xff] %vm501, %v505
        %509 = vrot.lane.b32.xlu0 %v464, 120
        %v510 = vpop.permute.xlu0 %509
        %s512 = scalar_lea.vmem %s333, 8 [#allocation7]
        %513 = vst.msk [vmem:[%s512] sm:$0xff] %vm501, %v510
        %s514 = scalar_lea.vmem %s340, 8 [#allocation8]
        %515 = vst.msk [vmem:[%s514] sm:$0xff] %vm501, %v486
        %516 = vrot.lane.b32.xlu0 %v461, 56
        %v517 = vpop.permute.xlu0 %516
        %s519 = scalar_lea.vmem %s347, 8 [#allocation10]
        %520 = vst.msk [vmem:[%s519] sm:$0xff] %vm501, %v517
        %521 = vrot.lane.b32.xlu0 %v464, 112
        %v522 = vpop.permute.xlu0 %521
        %s524 = scalar_lea.vmem %s333, 16 [#allocation7]
        %525 = vst.msk [vmem:[%s524] sm:$0xff] %vm501, %v522
        %s526 = scalar_lea.vmem %s340, 16 [#allocation8]
        %527 = vst.msk [vmem:[%s526] sm:$0xff] %vm501, %v487
        %528 = vrot.lane.b32.xlu0 %v461, 48
        %v529 = vpop.permute.xlu0 %528
        %s531 = scalar_lea.vmem %s347, 16 [#allocation10]
        %532 = vst.msk [vmem:[%s531] sm:$0xff] %vm501, %v529
        %533 = vrot.lane.b32.xlu0 %v464, 104
        %v534 = vpop.permute.xlu0 %533
        %s536 = scalar_lea.vmem %s333, 24 [#allocation7]
        %537 = vst.msk [vmem:[%s536] sm:$0xff] %vm501, %v534
        %s538 = scalar_lea.vmem %s340, 24 [#allocation8]
        %539 = vst.msk [vmem:[%s538] sm:$0xff] %vm501, %v488
        %540 = vrot.lane.b32.xlu0 %v461, 40
        %v541 = vpop.permute.xlu0 %540
        %s543 = scalar_lea.vmem %s347, 24 [#allocation10]
        %544 = vst.msk [vmem:[%s543] sm:$0xff] %vm501, %v541
        %s545 = sand.u32 %s163, 1
        %s546 = scalar_lea.sflag [#allocation4], %s545
        %s547 = sand.u32 %s163, 1
        %s548 = smul.addr %s547, 32
        %s549 = scalar_lea.vmem [#allocation7], %s548
        %s550 = sand.u32 %s29, 1
        %s551 = scalar_lea.sflag [#allocation9], %s550
        %s552 = sand.u32 %s191, 1
        %s553 = smul.addr %s552, 32
        %s554 = scalar_lea.vmem [#allocation8], %s553
        %s555 = sand.u32 %s29, 1
        %s556 = scalar_lea.sflag [#allocation9], %s555
        %s557 = sand.u32 %s219, 1
        %s558 = smul.addr %s557, 32
        %s559 = scalar_lea.vmem [#allocation10], %s558
        // Predicated region
        $region49: #{tpu_custom_call.1} parent=39 // pred_check
          %p560 = pneg %p173
        $region50: #{tpu_custom_call.1} parent=39 // pred_check_branch
          %562 = sbr.rel (%p560) target = $region52
        $region51: #{tpu_custom_call.1} parent=39 // pred_region
          %s564 = ssub.s32 512, 512
          %565 = vsyncadd %s546, %s564
          %s566 = smul.addr %s33, 4
          %s567 = sadd.s32 %s34, %s566
          %s568 = smul.addr %s567, 128
          %s569 = scalar_lea.hbm %s5, %s568
          %s570 = sshll.u32 %s549, 4
          %s571 = int_to_ptr.vmem [resolvable:$true] %s570
          %576 = dma.vmem_to_hbm [thread:$0]  %s571, 512, %s569, %s546, 128, 128, 8
        $region52: #{tpu_custom_call.1} parent=39 // pred_fallthru
          _
        // Predicated region
        $region53: #{tpu_custom_call.1} parent=39 // pred_check
          %p577 = pneg %p201
        $region54: #{tpu_custom_call.1} parent=39 // pred_check_branch
          %579 = sbr.rel (%p577) target = $region56
        $region55: #{tpu_custom_call.1} parent=39 // pred_region
          %s581 = ssub.s32 512, 512
          %582 = vsyncadd %s551, %s581
          %s583 = smul.addr %s33, 4
          %s584 = sadd.s32 %s34, %s583
          %s585 = smul.addr %s584, 128
          %s586 = scalar_lea.hbm %s6, %s585
          %s587 = sshll.u32 %s554, 4
          %s588 = int_to_ptr.vmem [resolvable:$true] %s587
          %593 = dma.vmem_to_hbm [thread:$0]  %s588, 512, %s586, %s551, 128, 128, 8
        $region56: #{tpu_custom_call.1} parent=39 // pred_fallthru
          _
        // Predicated region
        $region57: #{tpu_custom_call.1} parent=39 // pred_check
          %p594 = pneg %p229
        $region58: #{tpu_custom_call.1} parent=39 // pred_check_branch
          %596 = sbr.rel (%p594) target = $region60
        $region59: #{tpu_custom_call.1} parent=39 // pred_region
          %s598 = ssub.s32 512, 512
          %599 = vsyncadd %s556, %s598
          %s600 = smul.addr %s33, 4
          %s601 = sadd.s32 %s34, %s600
          %s602 = smul.addr %s601, 128
          %s603 = scalar_lea.hbm %s7, %s602
          %s604 = sshll.u32 %s559, 4
          %s605 = int_to_ptr.vmem [resolvable:$true] %s604
          %610 = dma.vmem_to_hbm [thread:$0]  %s605, 512, %s603, %s556, 128, 128, 8
        $region60: #{tpu_custom_call.1} parent=39 // pred_fallthru
          _
      $region40: #{tpu_custom_call.1} parent=5 // pred_fallthru
        _
      %p611 = scmp.le.s32.totalorder 2, %s24
      // Predicated region
      $region61: #{tpu_custom_call.1} parent=5 // pred_check
        %p612 = pneg %p611
      $region62: #{tpu_custom_call.1} parent=5 // pred_check_branch
        %614 = sbr.rel (%p612) target = $region64
      $region63: #{tpu_custom_call.1} parent=5 // pred_region
        %s615 = ssub.s32 %s24, 2
        // Predicated region
        $region65: #{tpu_custom_call.1} parent=63 // pred_check
          %p616 = pneg %p179
        $region66: #{tpu_custom_call.1} parent=63 // pred_check_branch
          %618 = sbr.rel (%p616) target = $region68
        $region67: #{tpu_custom_call.1} parent=63 // pred_region
          %s619 = sand.u32 %s164, 1
          %s620 = scalar_lea.sflag [#allocation4], %s619
          %s621 = sand.u32 %s164, 1
          %s622 = smul.addr %s621, 32
          %s623 = scalar_lea.vmem [#allocation7], %s622
          %624 = dma.done %s620, 512
        $region68: #{tpu_custom_call.1} parent=63 // pred_fallthru
          _
        // Predicated region
        $region69: #{tpu_custom_call.1} parent=63 // pred_check
          %p625 = pneg %p207
        $region70: #{tpu_custom_call.1} parent=63 // pred_check_branch
          %627 = sbr.rel (%p625) target = $region72
        $region71: #{tpu_custom_call.1} parent=63 // pred_region
          %s628 = sand.u32 %s30, 1
          %s629 = scalar_lea.sflag [#allocation9], %s628
          %s630 = sand.u32 %s192, 1
          %s631 = smul.addr %s630, 32
          %s632 = scalar_lea.vmem [#allocation8], %s631
          %633 = dma.done %s629, 512
        $region72: #{tpu_custom_call.1} parent=63 // pred_fallthru
          _
        // Predicated region
        $region73: #{tpu_custom_call.1} parent=63 // pred_check
          %p634 = pneg %p235
        $region74: #{tpu_custom_call.1} parent=63 // pred_check_branch
          %636 = sbr.rel (%p634) target = $region76
        $region75: #{tpu_custom_call.1} parent=63 // pred_region
          %s637 = sand.u32 %s30, 1
          %s638 = scalar_lea.sflag [#allocation9], %s637
          %s639 = sand.u32 %s220, 1
          %s640 = smul.addr %s639, 32
          %s641 = scalar_lea.vmem [#allocation10], %s640
          %642 = dma.done %s638, 512
        $region76: #{tpu_custom_call.1} parent=63 // pred_fallthru
          _
      $region64: #{tpu_custom_call.1} parent=5 // pred_fallthru
        _
    $region6: #{tpu_custom_call.1} parent=1 // loop_footer
      %s28 = sadd.s32 1, %s24
    $region7: #{tpu_custom_call.1} parent=1 // loop_footer_branch
      %23 = sbr.rel target = $region3
    $region8: #{tpu_custom_call.1} parent=1 // loop_exit
      _
    %643 = vsyncpa [#allocation3], 1
    %s644 = scalar_lea.sflag [#allocation3], 1
    %645 = vsyncpa %s644, 1
    %646 = vsyncpa [#allocation6], 1
    %647 = vsyncpa [#allocation4], 1
    %s648 = scalar_lea.sflag [#allocation4], 1
    %649 = vsyncpa %s648, 1
    %650 = vsyncpa [#allocation9], 1
    %s651 = scalar_lea.sflag [#allocation9], 1
    %652 = vsyncpa %s651, 1

</llo_original>
